<compile_context>
chip_gen: v6e
topology: v6e:2x2x1
jax: 0.10.0
libtpu: 0.0.40
codegen_flags: <defaults>
</compile_context>

<pallas_src>
import functools
import math

import jax
import jax.numpy as jnp
from jax.experimental import pallas as pl
from jax.experimental.pallas import tpu as pltpu

# `beta` is an undefined module-level global in the reference PyTorch code;
# we fix it to a deterministic constant here.
BETA = 1.0


def _round_up(x, m):
    return ((x + m - 1) // m) * m


def _vmem_capacity_bytes():
    """Physical VMEM of the local TPU generation (v7x-safe fallback)."""
    try:
        return int(pltpu.get_tpu_info().vmem_capacity_bytes)
    except Exception:
        return 64 * 1024 * 1024


# --------------------------------------------------------------------------
# Pallas kernel 1: adaptive weight quantization (lane-dense layout)
#   p_ref: (L, tm)  levels on sublanes, flattened weight index on lanes
#   q_ref: (L, 1)   quantization levels
#   w_ref: (1, tm)  quantized weight (lane-dense output)
# train: w = sum_l softmax_l(beta * p/||p||)_l * q_l
# test : w = q[argmax_l softmax_l(...)]   (first max wins, like torch.max)
# --------------------------------------------------------------------------
def _quant_weight_kernel(p_ref, q_ref, w_ref, *, num_levels, mode):
    p = p_ref[...]                                      # (L, tm) f32
    ss = jnp.sum(p * p, axis=0, keepdims=True)          # (1, tm)
    # Guard against all-zero level vectors (and padded lanes); the reference
    # would produce NaN there (documented semantic difference).
    inv_norm = jax.lax.rsqrt(jnp.maximum(ss, 1e-30))    # EUP rsqrt
    p_n = p * inv_norm
    e = jnp.exp(BETA * p_n)                             # |arg| <= BETA, safe
    s = e / jnp.sum(e, axis=0, keepdims=True)           # exact (no approx bias)
    q = q_ref[...]                                      # (L, 1)
    if mode == "train":
        w_ref[...] = jnp.sum(s * q, axis=0, keepdims=True)
    else:  # "test": pick q[argmax_l s], first maximum wins
        best = s[0:1, :]
        sel = jnp.zeros_like(best) + q[0:1, :]
        for l in range(1, num_levels):
            sl = s[l:l + 1, :]
            better = sl > best
            sel = jnp.where(better, q[l:l + 1, :], sel)
            best = jnp.maximum(best, sl)
        w_ref[...] = sel


def quantize_conv_weight(p_c, q_level, mode="train", tm=2048):
    """Quantized conv weights laid out as (O, K*K, C) float32.

    Tap index t = kj*K + ki (kj = height offset, ki = width offset)."""
    O, C, K, K2, L = p_c.shape
    assert K == K2
    M = O * K * K * C
    # Flatten to (L, M) with M ordered (o, kj, ki, c) so the output reshapes
    # straight into the (O, K*K, C) layout the conv weight slab wants.
    p_t = jnp.transpose(p_c, (4, 0, 2, 3, 1)).reshape(L, M).astype(jnp.float32)
    tm_eff = max(128, min(tm, _round_up(M, 128)))
    n_blk = pl.cdiv(M, tm_eff)
    Mp = n_blk * tm_eff
    if Mp != M:
        # Pad with ones: harmless, keeps the norm well-defined in padded lanes
        # (they are sliced off afterwards).
        p_t = jnp.pad(p_t, ((0, 0), (0, Mp - M)), constant_values=1.0)
    q2 = q_level.reshape(L, 1).astype(jnp.float32)

    w_flat = pl.pallas_call(
        functools.partial(_quant_weight_kernel, num_levels=L, mode=mode),
        out_shape=jax.ShapeDtypeStruct((1, Mp), jnp.float32),
        grid=(n_blk,),
        in_specs=[
            pl.BlockSpec((L, tm_eff), lambda j: (0, j)),
            pl.BlockSpec((L, 1), lambda j: (0, 0)),
        ],
        out_specs=pl.BlockSpec((1, tm_eff), lambda j: (0, j)),
        compiler_params=pltpu.CompilerParams(
            dimension_semantics=("parallel",)),
    )(p_t, q2)
    return w_flat[0, :M].reshape(O, K * K, C)


# --------------------------------------------------------------------------
# Pallas kernel 2: fused im2col + deep-matmul convolution (stride-1 core)
#
#   For each output-row block of TH rows:
#     slab[h, (kj*K+ki)*C_pad + c, w] = x_tile[kj + h, c, ki + w]
#     out[o, h, w] = dot(w_slab[o, :], slab[h, :, w])     (depth K*K*C_pad)
#
#   * K*K shifted-window copies build the slab once per grid step (aligned
#     sublane/lane destinations; shifts are reused across the TH rows).
#   * One MXU matmul per output row with contraction depth K*K*C_pad instead
#     of K*K shallow depth-C matmuls.
#   * Output rows are stored at lane-aligned offsets h*Wo_pad of a flat,
#     lane-dense (1, to, TH*Wo_pad) block (unmasked vst).
# --------------------------------------------------------------------------
def _make_conv_kernel(K, C_pad, TH, Wo_pad):
    KK = K * K

    def conv_kernel(w_ref, x_ref, o_ref, slab_ref):
        # w_ref   : (to, KK*C_pad)            bf16
        # x_ref   : (1, TH+K-1, C_pad, W_in)  bf16
        # o_ref   : (1, to, TH*Wo_pad)        f32
        # slab_ref: (TH, KK*C_pad, Wo_pad)    bf16  (VMEM scratch)
        for kj in range(K):
            for ki in range(K):
                t = kj * K + ki
                slab_ref[:, t * C_pad:(t + 1) * C_pad, :] = (
                    x_ref[0, kj:kj + TH, :, ki:ki + Wo_pad])
        for h in range(TH):
            o_ref[0, :, h * Wo_pad:(h + 1) * Wo_pad] = jnp.dot(
                w_ref[...], slab_ref[h],
                preferred_element_type=jnp.float32).astype(o_ref.dtype)

    return conv_kernel


# --------------------------------------------------------------------------
# Forward pass reproducing MyConv2d.forward semantics ('train' and 'test')
# --------------------------------------------------------------------------
def my_conv2d_forward(x, p_c, q_level, ksize, stride, padding, mode="train",
                      out_dtype=jnp.float32):
    assert x.ndim == 4
    if mode not in ("train", "test"):
        raise ValueError('Unknown run mode "{}"'.format(mode))

    B, C, H, W = x.shape
    O = p_c.shape[0]
    K = ksize
    KK = K * K

    # Kernel 1: quantized taps, (O, K*K, C)
    w_q = quantize_conv_weight(p_c, q_level, mode=mode)

    # ---- geometry (stride-1 core; stride>1 subsamples afterwards) ----
    Hp, Wp = H + 2 * padding, W + 2 * padding
    Ho1, Wo1 = Hp - K + 1, Wp - K + 1          # stride-1 output size
    Wo_pad = _round_up(Wo1, 128)               # lane-dense output rows
    W_in = _round_up(Wo_pad + K - 1, 128)      # input row width (>= Wp)
    C_pad = _round_up(C, 8)                    # aligned sublane slots in slab
    KKCp = KK * C_pad

    # ---- output-channel tiling (minimize padding waste, to <= 256) ----
    if O <= 256:
        to = _round_up(O, 8)
        O_pad = to
    else:
        to, O_pad = None, None
        for cand in (256, 128, 64):
            opad = _round_up(O, cand)
            if O_pad is None or opad < O_pad:
                to, O_pad = cand, opad
    n_ob = O_pad // to

    # ---- output-row tile: largest that fits the generation's VMEM budget ----
    out_bytes = jnp.dtype(out_dtype).itemsize
    cap = _vmem_capacity_bytes()
    budget = int(cap * 0.7)

    def _need(th):
        th_in = th + K - 1
        x_b = th_in * C_pad * W_in * 2
        w_b = to * KKCp * 2
        o_b = to * th * Wo_pad * out_bytes
        slab = th * KKCp * Wo_pad * 2
        return 2 * (x_b + w_b + o_b) + slab    # double-buffered blocks + slab

    th_cap = _round_up(Ho1, 8)
    TH = 8
    for cand in (32, 24, 16, 8):
        th_c = min(cand, th_cap)
        if _need(th_c) <= budget:
            TH = th_c
            break
    n_hb = _round_up(Ho1, TH) // TH
    # v7x has 2 TensorCores: make sure the (all-"parallel") grid has >= 2 steps.
    if B * n_ob * n_hb < 2 and Ho1 > 8:
        TH = max(8, _round_up(-(-Ho1 // 2), 8))
        n_hb = _round_up(Ho1, TH) // TH
    TH_in = TH + K - 1
    Ho_pad = n_hb * TH
    H_big = Ho_pad + K - 1
    vmem_limit = int(min(cap * 9 // 10,
                         max(int(_need(TH) * 1.3), 8 * 1024 * 1024)))

    # ---- weight slab (O_pad, K*K*C_pad); contraction idx = (kj*K+ki)*C_pad+c ----
    w_slab = jnp.pad(w_q, ((0, O_pad - O), (0, 0), (0, C_pad - C)))
    w_slab = w_slab.reshape(O_pad, KKCp).astype(jnp.bfloat16)

    # ---- input: zero-pad, then overlapping halo'd row tiles, rows-major ----
    xb = x.astype(jnp.bfloat16)                 # halve HBM/DMA bytes (bf16 MXU)
    xp = jnp.pad(xb, ((0, 0), (0, C_pad - C),
                      (padding, H_big - H - padding),
                      (padding, W_in - W - padding)))
    row_idx = (jnp.arange(n_hb) * TH)[:, None] + jnp.arange(TH_in)[None, :]
    x_t = xp[:, :, row_idx, :]                  # (B, C_pad, n_hb, TH_in, W_in)
    x_t = jnp.transpose(x_t, (0, 2, 3, 1, 4))   # (B, n_hb, TH_in, C_pad, W_in)
    x_t = x_t.reshape(B * n_hb, TH_in, C_pad, W_in)

    conv_kernel = _make_conv_kernel(K, C_pad, TH, Wo_pad)
    out_flat = pl.pallas_call(
        conv_kernel,
        out_shape=jax.ShapeDtypeStruct((B, O_pad, Ho_pad * Wo_pad), out_dtype),
        # Weights outermost: each weight block is DMA'd once per O block, not
        # once per batch element.  All axes are independent -> "parallel".
        grid=(n_ob, B, n_hb),
        in_specs=[
            pl.BlockSpec((to, KKCp), lambda ob, b, hb: (ob, 0)),
            pl.BlockSpec((1, TH_in, C_pad, W_in),
                         lambda ob, b, hb: (b * n_hb + hb, 0, 0, 0)),
        ],
        out_specs=pl.BlockSpec((1, to, TH * Wo_pad),
                               lambda ob, b, hb: (b, ob, hb)),
        scratch_shapes=[pltpu.VMEM((TH, KKCp, Wo_pad), jnp.bfloat16)],
        compiler_params=pltpu.CompilerParams(
            dimension_semantics=("parallel", "parallel", "parallel"),
            vmem_limit_bytes=vmem_limit),
    )(w_slab, x_t)

    # Epilogue: free reshape + slice only (no pad / full rewrite pass).
    out = out_flat.reshape(B, O_pad, Ho_pad, Wo_pad)[:, :O, :Ho1, :Wo1]
    if stride > 1:
        # TODO(synk): phase-decompose the input for stride>1 instead of
        # computing the full stride-1 output and subsampling (s^2 extra work).
        out = out[:, :, ::stride, ::stride]
    return out


# --------------------------------------------------------------------------
# Deterministic parameter init matching MyConv2d.__init__ / reset_parameters
# --------------------------------------------------------------------------
def init_params(key, in_channel, out_channel, ksize, num_level_conv,
                prim_init="uniform"):
    k_p, k_q = jax.random.split(key)
    shape = (out_channel, in_channel, ksize, ksize, num_level_conv)
    if prim_init == "uniform":
        p_c = jax.random.uniform(k_p, shape, dtype=jnp.float32)
    else:
        p_c = jax.random.normal(k_p, shape, dtype=jnp.float32)
    fan_in = in_channel * ksize * ksize
    a = math.sqrt(5.0)
    gain = math.sqrt(2.0 / (1.0 + a ** 2))
    std = gain / math.sqrt(fan_in)
    bound = math.sqrt(3.0) * std
    q_level = jax.random.uniform(k_q, (num_level_conv,), dtype=jnp.float32,
                                 minval=-bound, maxval=bound)
    return p_c, q_level


# --------------------------------------------------------------------------
# Pure-JAX reference for correctness checking
# --------------------------------------------------------------------------
def reference_forward(x, p_c, q_level, ksize, stride, padding, mode="train"):
    norm = jnp.sqrt(jnp.sum(p_c ** 2, axis=-1, keepdims=True))
    p_n = p_c / norm
    e = jnp.exp(BETA * p_n)
    s = e / jnp.sum(e, axis=-1, keepdims=True)
    if mode == "train":
        conv_w = jnp.einsum("abcde,e->abcd", s, q_level)
    else:
        conv_w = q_level[jnp.argmax(s, axis=-1)]
    return jax.lax.conv_general_dilated(
        x, conv_w, window_strides=(stride, stride),
        padding=[(padding, padding), (padding, padding)],
        dimension_numbers=("NCHW", "OIHW", "NCHW"))


if __name__ == "__main__":
    B, C_in, C_out = 2, 4, 8
    H = W = 16
    ksize, stride, padding = 3, 1, 1
    num_level_conv = 4

    key = jax.random.PRNGKey(0)
    k_x, k_param = jax.random.split(key)
    x = jax.random.normal(k_x, (B, C_in, H, W), dtype=jnp.float32)
    p_c, q_level = init_params(k_param, C_in, C_out, ksize, num_level_conv,
                               prim_init="uniform")

    for mode in ("train", "test"):
        out = my_conv2d_forward(x, p_c, q_level, ksize, stride, padding,
                                mode=mode)
        out = jax.block_until_ready(out)
        ref = reference_forward(x, p_c, q_level, ksize, stride, padding,
                                mode=mode)
        assert out.shape == ref.shape, (mode, out.shape, ref.shape)
        # bf16 matmul inputs (f32 accumulation) -> slightly loose tolerance.
        max_err = float(jnp.max(jnp.abs(out - ref)))
        assert jnp.allclose(out, ref, rtol=2e-2, atol=2e-2), (mode, max_err)

    print("KERNEL_OK")
</pallas_src>

<mosaic_0001>
module attributes {stable_mosaic.version = 11 : i64} {
  func.func @_quant_weight_kernel(%arg0: i32, %arg1: memref<4x384xf32, #tpu.memory_space<vmem>>, %arg2: memref<4x1xf32, #tpu.memory_space<vmem>>, %arg3: memref<1x384xf32, #tpu.memory_space<vmem>>) attributes {dimension_semantics = [#tpu.dimension_semantics<parallel>], iteration_bounds = array<i64: 1>, scalar_prefetch = 0 : i64, scratch_operands = 0 : i64, tpu.core_type = #tpu.core_type<tc>, window_params = [{transform_indices = @transform_0, window_bounds = array<i64: 4, 384>}, {pipeline_mode = #tpu.pipeline_mode<synchronous>, transform_indices = @transform_1, window_bounds = array<i64: 4, 1>}, {transform_indices = @transform_2, window_bounds = array<i64: 1, 384>}]} {
    %c0 = arith.constant 0 : index
    %c0_0 = arith.constant 0 : index
    %0 = vector.load %arg1[%c0, %c0_0] : memref<4x384xf32, #tpu.memory_space<vmem>>, vector<4x384xf32>
    %1 = arith.mulf %0, %0 : vector<4x384xf32>
    %cst = arith.constant dense<0.000000e+00> : vector<384xf32>
    %2 = vector.multi_reduction <add>, %1, %cst [0] : vector<4x384xf32> to vector<384xf32>
    %3 = vector.shape_cast %2 : vector<384xf32> to vector<1x384xf32>
    %cst_1 = arith.constant 1.000000e-30 : f32
    %4 = vector.broadcast %cst_1 : f32 to vector<1x384xf32>
    %5 = arith.maximumf %3, %4 : vector<1x384xf32>
    %6 = math.rsqrt %5 : vector<1x384xf32>
    %7 = vector.broadcast %6 : vector<1x384xf32> to vector<4x384xf32>
    %8 = arith.mulf %0, %7 : vector<4x384xf32>
    %cst_2 = arith.constant 1.000000e+00 : f32
    %9 = vector.broadcast %cst_2 : f32 to vector<4x384xf32>
    %10 = arith.mulf %9, %8 : vector<4x384xf32>
    %11 = math.exp %10 : vector<4x384xf32>
    %cst_3 = arith.constant dense<0.000000e+00> : vector<384xf32>
    %12 = vector.multi_reduction <add>, %11, %cst_3 [0] : vector<4x384xf32> to vector<384xf32>
    %13 = vector.shape_cast %12 : vector<384xf32> to vector<1x384xf32>
    %14 = vector.broadcast %13 : vector<1x384xf32> to vector<4x384xf32>
    %15 = arith.divf %11, %14 : vector<4x384xf32>
    %c0_4 = arith.constant 0 : index
    %c0_5 = arith.constant 0 : index
    %16 = vector.load %arg2[%c0_4, %c0_5] : memref<4x1xf32, #tpu.memory_space<vmem>>, vector<4x1xf32>
    %17 = vector.broadcast %16 : vector<4x1xf32> to vector<4x384xf32>
    %18 = arith.mulf %15, %17 : vector<4x384xf32>
    %cst_6 = arith.constant dense<0.000000e+00> : vector<384xf32>
    %19 = vector.multi_reduction <add>, %18, %cst_6 [0] : vector<4x384xf32> to vector<384xf32>
    %20 = vector.shape_cast %19 : vector<384xf32> to vector<1x384xf32>
    %c0_7 = arith.constant 0 : index
    %c0_8 = arith.constant 0 : index
    %21 = vector.load %arg3[%c0_7, %c0_8] : memref<1x384xf32, #tpu.memory_space<vmem>>, vector<1x384xf32>
    tpu.vector_store %arg3[%c0_7, %c0_8], %20 {strides = array<i32>} : memref<1x384xf32, #tpu.memory_space<vmem>>, vector<1x384xf32>,
    return
  }
  func.func @transform_0(%arg0: i32) -> (i32, i32) {
    %c0_i32 = arith.constant 0 : i32
    %c0_i32_0 = arith.constant 0 : i32
    return %c0_i32, %arg0 : i32, i32
  }
  func.func @transform_1(%arg0: i32) -> (i32, i32) {
    %c0_i32 = arith.constant 0 : i32
    %c0_i32_0 = arith.constant 0 : i32
    %c0_i32_1 = arith.constant 0 : i32
    return %c0_i32, %c0_i32_0 : i32, i32
  }
  func.func @transform_2(%arg0: i32) -> (i32, i32) {
    %c0_i32 = arith.constant 0 : i32
    %c0_i32_0 = arith.constant 0 : i32
    return %c0_i32, %arg0 : i32, i32
  }
}

</mosaic_0001>

<llo_original>
// kernel: tpu_custom_call.1
$region0: #{tpu_custom_call.1}
  #allocation0 [shape = 'u32[]', space=smem, size = 0x4, offset = 0x4, fixed_abs, tag = 'smem constant byte address 0x4 - core index']
  #allocation1 [shape = 'u32[144,128]{1,0:T(1,128)}', space=vmem, size = 0x12000, scoped, tag = 'internal scratch']
  %s0 = inlined_call_operand.hbm [shape: f32[4,384], index: 0, kind: input, shape index: {}]
  %s1 = inlined_call_operand.vmem [shape: f32[4,1], index: 1, kind: input, shape index: {}]
  %s2 = inlined_call_operand.hbm [shape: f32[1,384], index: 2, kind: output, shape index: {}]
  %s3 = sld [smem:[#allocation0]]
  $region22: #{tpu_custom_call.1} parent=0
    _
  %s5 = ssub.s32 1, %s3
  %s6 = scalar_select 0, %s5, %s3
  $region1: #{tpu_custom_call.1} parent=0
    #allocation2 [shape = 'u8[6144]{0}', space=vmem, size = 0x1800, scoped, tag = 'input window, operand 0, single buffered']
    #allocation3 [shape = 's32[1]{0}', space=sflag, size = 0x4, scoped, tag = 'scoped memory for tpu_custom_call.1']
    #allocation4 [shape = 's32[1]{0}', space=sflag, size = 0x4, scoped, tag = 'scoped memory for tpu_custom_call.1']
    #allocation5 [shape = 'u8[1536]{0}', space=vmem, size = 0x800, scoped, tag = 'output window, operand 0, single buffered']
    %7 = vsyncpa [#allocation3], 0
    %8 = vsyncpa [#allocation4], 0
    // Predicated region
    $region2: #{tpu_custom_call.1} parent=1 // pred_check
      _
    $region3: #{tpu_custom_call.1} parent=1 // pred_check_branch
      %10 = sbr.rel (0) target = $region5
    $region4: #{tpu_custom_call.1} parent=1 // pred_region
      %s12 = ssub.s32 192, 192
      %13 = vsyncadd [#allocation3], %s12
      %s15 = sshll.u32 [#allocation2], 4
      %s16 = int_to_ptr.vmem [resolvable:$true] %s15
      %18 = dma.hbm_to_vmem [thread:$0]  %s0, 192, %s16, [#allocation3]
    $region5: #{tpu_custom_call.1} parent=1 // pred_fallthru
      _
    // Predicated region
    $region6: #{tpu_custom_call.1} parent=1 // pred_check
      _
    $region7: #{tpu_custom_call.1} parent=1 // pred_check_branch
      %20 = sbr.rel (0) target = $region9
    $region8: #{tpu_custom_call.1} parent=1 // pred_region
      _
    $region9: #{tpu_custom_call.1} parent=1 // pred_fallthru
      _
    // Predicated region
    $region10: #{tpu_custom_call.1} parent=1 // pred_check
      _
    $region11: #{tpu_custom_call.1} parent=1 // pred_check_branch
      %22 = sbr.rel (0) target = $region13
    $region12: #{tpu_custom_call.1} parent=1 // pred_region
      %23 = dma.done [#allocation3], 192
    $region13: #{tpu_custom_call.1} parent=1 // pred_fallthru
      _
    %v24 = vld [vmem:[#allocation2] sm:$0xff]
    %v25 = vld [vmem:[#allocation2 + $0x8] sm:$0xf]
    %v26 = vmul.f32 %v24, %v24
    %v27 = vmul.f32 %v25, %v25
    %v29 = vcombine.high %v26, %v26
    %vm31 = vcmask 1043456
    %v32 = vsel %vm31, %v26, 0.0
    %v33 = vrot.slane %v32, 4
    %v34 = vadd.f32 %v32, %v33
    %v35 = vrot.slane %v34, 2
    %v36 = vadd.f32 %v34, %v35
    %v37 = vrot.slane %v36, 1
    %v38 = vadd.f32 %v36, %v37
    %v39 = vsel %vm31, %v29, 0.0
    %v40 = vrot.slane %v39, 4
    %v41 = vadd.f32 %v39, %v40
    %v42 = vrot.slane %v41, 2
    %v43 = vadd.f32 %v41, %v42
    %v44 = vrot.slane %v43, 1
    %v45 = vadd.f32 %v43, %v44
    %v46 = vsel %vm31, %v27, 0.0
    %v47 = vrot.slane %v46, 4
    %v48 = vadd.f32 %v46, %v47
    %v49 = vrot.slane %v48, 2
    %v50 = vadd.f32 %v48, %v49
    %v51 = vrot.slane %v50, 1
    %v52 = vadd.f32 %v50, %v51
    %v53 = vmax.f32 %v38, 1e-30
    %v54 = vmax.f32 %v45, 1e-30
    %v55 = vmax.f32 %v52, 1e-30
    %v56 = vrsqrt.pop %v53
    %v57 = vrsqrt.pop %v54
    %v58 = vrsqrt.pop %v55
    %v61 = vcombine.low %v56, %v57
    %v63 = vmul.f32 %v24, %v61
    %v64 = vmul.f32 %v25, %v58
    %v65 = vmul.f32 %v63, 1.442695
    %v66 = vpow.pop %v65
    %v67 = vmul.f32 %v64, 1.442695
    %v68 = vpow.pop %v67
    %v70 = vcombine.high %v66, %v66
    %v72 = vsel %vm31, %v66, 0.0
    %v73 = vrot.slane %v72, 4
    %v74 = vadd.f32 %v72, %v73
    %v75 = vrot.slane %v74, 2
    %v76 = vadd.f32 %v74, %v75
    %v77 = vrot.slane %v76, 1
    %v78 = vadd.f32 %v76, %v77
    %v79 = vsel %vm31, %v70, 0.0
    %v80 = vrot.slane %v79, 4
    %v81 = vadd.f32 %v79, %v80
    %v82 = vrot.slane %v81, 2
    %v83 = vadd.f32 %v81, %v82
    %v84 = vrot.slane %v83, 1
    %v85 = vadd.f32 %v83, %v84
    %v86 = vsel %vm31, %v68, 0.0
    %v87 = vrot.slane %v86, 4
    %v88 = vadd.f32 %v86, %v87
    %v89 = vrot.slane %v88, 2
    %v90 = vadd.f32 %v88, %v89
    %v91 = vrot.slane %v90, 1
    %v92 = vadd.f32 %v90, %v91
    %v95 = vcombine.low %v78, %v85
    %v97 = vrcp.pop %v95
    %v98 = vmul.f32 %v66, %v97
    %v99 = vrcp.pop %v92
    %v100 = vmul.f32 %v68, %v99
    %v101 = vld [vmem:[%s1] sm:$0xf]
    %103 = vset.pattern.permute.xlu0 0
    %104 = vperm.xlu0 %103, %v101
    %v105 = vpop.permute.xlu0 %104
    %v107 = vunpack.c.l.s4 839922192
    %v108 = vunpack.c.0.s8 %v107
    %v109 = vlaneseq
    %v110 = vshrl.u32 %v109, 7
    %v111 = vsub.s32 %v108, %v110
    %v112 = vrot.slane %v105, %v111
    %v114 = vmul.f32 %v98, %v112
    %v115 = vmul.f32 %v100, %v112
    %v117 = vcombine.high %v114, %v114
    %v119 = vsel %vm31, %v114, 0.0
    %v120 = vrot.slane %v119, 4
    %v121 = vadd.f32 %v119, %v120
    %v122 = vrot.slane %v121, 2
    %v123 = vadd.f32 %v121, %v122
    %v124 = vrot.slane %v123, 1
    %v125 = vadd.f32 %v123, %v124
    %v126 = vsel %vm31, %v117, 0.0
    %v127 = vrot.slane %v126, 4
    %v128 = vadd.f32 %v126, %v127
    %v129 = vrot.slane %v128, 2
    %v130 = vadd.f32 %v128, %v129
    %v131 = vrot.slane %v130, 1
    %v132 = vadd.f32 %v130, %v131
    %v133 = vsel %vm31, %v115, 0.0
    %v134 = vrot.slane %v133, 4
    %v135 = vadd.f32 %v133, %v134
    %v136 = vrot.slane %v135, 2
    %v137 = vadd.f32 %v135, %v136
    %v138 = vrot.slane %v137, 1
    %v139 = vadd.f32 %v137, %v138
    %v143 = vcombine.low %v125, %v132
    %v145 = vunpack.c.l.s4 1966171168
    %v146 = vunpack.c.0.s8 %v145
    %v147 = vlaneseq
    %v148 = vshrl.u32 %v147, 7
    %v149 = vsub.s32 %v146, %v148
    %v150 = vrot.slane %v143, %v149
    %v152 = vunpack.c.l.s4 1966171168
    %v153 = vunpack.c.0.s8 %v152
    %v154 = vlaneseq
    %v155 = vshrl.u32 %v154, 7
    %v156 = vsub.s32 %v153, %v155
    %v157 = vrot.slane %v139, %v156
    %v158 = vcombine.low %v150, %v157
    %v160 = vunpack.c.l.s4 1966171168
    %v161 = vunpack.c.0.s8 %v160
    %v162 = vlaneseq
    %v163 = vshrl.u32 %v162, 7
    %v164 = vsub.s32 %v161, %v163
    %v165 = vrot.slane %v158, %v164
    %v167 = vlaneseq
    %vm168 = vcmp.ge.s32.totalorder %v167, 0
    %vm169 = vcmp.lt.s32.totalorder %v167, 384
    %vm170 = vmand %vm168, %vm169
    %171 = vst.msk [vmem:[#allocation5] sm:$0x7] %vm170, %v165
    // Predicated region
    $region14: #{tpu_custom_call.1} parent=1 // pred_check
      _
    $region15: #{tpu_custom_call.1} parent=1 // pred_check_branch
      %173 = sbr.rel (0) target = $region17
    $region16: #{tpu_custom_call.1} parent=1 // pred_region
      %s175 = ssub.s32 48, 48
      %176 = vsyncadd [#allocation4], %s175
      %s178 = sshll.u32 [#allocation5], 4
      %s179 = int_to_ptr.vmem [resolvable:$true] %s178
      %181 = dma.vmem_to_hbm [thread:$0]  %s179, 48, %s2, [#allocation4]
    $region17: #{tpu_custom_call.1} parent=1 // pred_fallthru
      _
    // Predicated region
    $region18: #{tpu_custom_call.1} parent=1 // pred_check
      _
    $region19: #{tpu_custom_call.1} parent=1 // pred_check_branch
      %183 = sbr.rel (0) target = $region21
    $region20: #{tpu_custom_call.1} parent=1 // pred_region
      %184 = dma.done [#allocation4], 48
    $region21: #{tpu_custom_call.1} parent=1 // pred_fallthru
      _
    %185 = vsyncpa [#allocation3], 1
    %186 = vsyncpa [#allocation4], 1

</llo_original>
